<compile_context>
chip_gen: v7x
topology: tpu7x:2x2x1
jax: 0.10.0
libtpu: 0.0.40
codegen_flags: <defaults>
</compile_context>

<pallas_src>
import functools

import jax
import jax.numpy as jnp
from jax import lax
from jax.experimental import pallas as pl
from jax.experimental.pallas import tpu as pltpu


def _self_attn_kernel(xq_ref, xkv_ref, wq_ref, wk_ref, wv_ref, o_ref, *,
                      heads, emb_size):
    # xq_ref : (1, tq, d_in)   query rows of the current batch element
    # xkv_ref: (1, t,  d_in)   full sequence of the current batch element
    # w*_ref : (d_in, h*e)     packed projection weights (VMEM-resident, head-major cols)
    # o_ref  : (1, tq, h*e)    final-layout output slab
    h, e = heads, emb_size
    xq = xq_ref[0]            # (tq, d_in)
    xkv = xkv_ref[0]          # (t, d_in)

    scale = e ** (-0.5)       # applied once to q; == e**(-1/4) on both q and k

    # Fused, lane-dense projections across all heads at once.
    q_all = jnp.dot(xq, wq_ref[...], preferred_element_type=jnp.float32) * scale  # (tq, h*e)
    k_all = jnp.dot(xkv, wk_ref[...], preferred_element_type=jnp.float32)         # (t,  h*e)
    v_all = jnp.dot(xkv, wv_ref[...], preferred_element_type=jnp.float32)         # (t,  h*e)

    outs = []
    for hi in range(h):       # small static head loop over lane slices
        q = q_all[:, hi * e:(hi + 1) * e]   # (tq, e)
        k = k_all[:, hi * e:(hi + 1) * e]   # (t,  e)
        v = v_all[:, hi * e:(hi + 1) * e]   # (t,  e)

        # q @ k^T without materializing the transpose: contract both on axis 1 (e).
        s = lax.dot_general(q, k, (((1,), (1,)), ((), ())),
                            preferred_element_type=jnp.float32)    # (tq, t)

        # Numerically-stable softmax with deferred normalization.
        m = jnp.max(s, axis=-1, keepdims=True)
        p = jnp.exp(s - m)
        denom = jnp.sum(p, axis=-1, keepdims=True)                  # (tq, 1)
        pv = jnp.dot(p, v, preferred_element_type=jnp.float32)      # (tq, e)
        outs.append(pv * pl.reciprocal(denom))                      # normalize after PV

    # One lane-dense store of the whole (tq, h*e) slab in the final layout.
    o_ref[0] = jnp.concatenate(outs, axis=-1).astype(o_ref.dtype)


def _pick_q_tile(t):
    for cand in (512, 256, 128):
        if t > cand and t % cand == 0:
            return cand
    return t


def self_attention(x, wq, wk, wv, heads, emb_size):
    """x: (b, t, d_in); wq/wk/wv packed as (d_in, heads*emb) (head-major columns).

    Returns (b, t, heads*emb), identical to the PyTorch module's forward.
    """
    b, t, d_in = x.shape
    h, e = heads, emb_size
    he = h * e
    assert wq.shape == (d_in, he) and wk.shape == (d_in, he) and wv.shape == (d_in, he)

    q_tile = _pick_q_tile(t)
    nq = t // q_tile

    kernel = functools.partial(_self_attn_kernel, heads=h, emb_size=e)

    # Advisory cost hint for XLA scheduling around the custom call.
    proj_flops = 3 * 2 * b * t * d_in * he
    attn_flops = 2 * 2 * b * h * t * t * e
    cost = pl.CostEstimate(
        flops=proj_flops + attn_flops,
        transcendentals=b * h * t * t,
        bytes_accessed=4 * (x.size + 3 * wq.size + b * t * he),
    )

    out = pl.pallas_call(
        kernel,
        out_shape=jax.ShapeDtypeStruct((b, t, he), jnp.float32),
        grid_spec=pltpu.PrefetchScalarGridSpec(
            num_scalar_prefetch=0,
            grid=(b, nq),
            in_specs=[
                # query rows (tiled over the second grid axis)
                pl.BlockSpec((1, q_tile, d_in), lambda bi, qi: (bi, qi, 0)),
                # full sequence for K/V of this batch element
                pl.BlockSpec((1, t, d_in), lambda bi, qi: (bi, 0, 0)),
                # packed weights: constant block index -> fetched once, VMEM-resident
                pl.BlockSpec((d_in, he), lambda bi, qi: (0, 0)),
                pl.BlockSpec((d_in, he), lambda bi, qi: (0, 0)),
                pl.BlockSpec((d_in, he), lambda bi, qi: (0, 0)),
            ],
            out_specs=pl.BlockSpec((1, q_tile, he), lambda bi, qi: (bi, qi, 0)),
        ),
        compiler_params=pltpu.CompilerParams(
            dimension_semantics=("parallel", "parallel"),
            vmem_limit_bytes=32 * 1024 * 1024,
        ),
        cost_estimate=cost,
    )(x, x, wq, wk, wv)
    return out


def _reference(x, wq, wk, wv, heads, emb_size):
    """Pure-JAX replica of the PyTorch forward (packed (d_in, h*e) weights)."""
    b, t, d_in = x.shape
    h, e = heads, emb_size
    inv_scale = e ** (1 / 4)
    q = (x @ wq).reshape(b, t, h, e).transpose(0, 2, 1, 3) / inv_scale
    k = (x @ wk).reshape(b, t, h, e).transpose(0, 2, 1, 3) / inv_scale
    v = (x @ wv).reshape(b, t, h, e).transpose(0, 2, 1, 3)
    dot = jnp.einsum("bhqe,bhke->bhqk", q, k)
    dot = jax.nn.softmax(dot, axis=-1)
    out = jnp.einsum("bhqk,bhke->bhqe", dot, v)
    return out.transpose(0, 2, 1, 3).reshape(b, t, h * e)


if __name__ == "__main__":
    # Small, module-consistent shapes.
    b, t = 2, 8
    input_size = 32
    heads = 2
    embed_size = 16

    key = jax.random.PRNGKey(0)
    kx, kq, kk, kv = jax.random.split(key, 4)

    x = jax.random.normal(kx, (b, t, input_size), dtype=jnp.float32)

    # nn.Linear(input_size, emb*heads, bias=False) has weight (h*e, d_in); y = x @ W.T.
    # The kernel consumes W.T directly as a packed (d_in, h*e) slab whose columns are
    # head-major / emb-minor, exactly matching the .view(b, t, h, e) in the module.
    def make_w(k):
        w = 0.1 * jax.random.normal(k, (heads * embed_size, input_size), jnp.float32)
        return w.T  # (d_in, h*e)

    wq = make_w(kq)
    wk = make_w(kk)
    wv = make_w(kv)

    out = self_attention(x, wq, wk, wv, heads, embed_size)
    out = jax.block_until_ready(out)

    ref = _reference(x, wq, wk, wv, heads, embed_size)
    assert out.shape == (b, t, heads * embed_size)
    max_err = float(jnp.max(jnp.abs(out - ref)))
    assert jnp.allclose(out, ref, atol=2e-5, rtol=2e-5), f"max abs err {max_err}"

    print("KERNEL_OK")
</pallas_src>

<mosaic_0001>
module attributes {stable_mosaic.version = 11 : i64} {
  func.func @_self_attn_kernel(%arg0: i32, %arg1: i32, %arg2: memref<1x8x32xf32, #tpu.memory_space<vmem>>, %arg3: memref<1x8x32xf32, #tpu.memory_space<vmem>>, %arg4: memref<32x32xf32, #tpu.memory_space<vmem>>, %arg5: memref<32x32xf32, #tpu.memory_space<vmem>>, %arg6: memref<32x32xf32, #tpu.memory_space<vmem>>, %arg7: memref<1x8x32xf32, #tpu.memory_space<vmem>>) attributes {dimension_semantics = [#tpu.dimension_semantics<parallel>, #tpu.dimension_semantics<parallel>], iteration_bounds = array<i64: 2, 1>, scalar_prefetch = 0 : i64, scratch_operands = 0 : i64, tpu.core_type = #tpu.core_type<tc>, window_params = [{transform_indices = @transform_0, window_bounds = array<i64: 1, 8, 32>}, {transform_indices = @transform_1, window_bounds = array<i64: 1, 8, 32>}, {pipeline_mode = #tpu.pipeline_mode<synchronous>, transform_indices = @transform_2, window_bounds = array<i64: 32, 32>}, {pipeline_mode = #tpu.pipeline_mode<synchronous>, transform_indices = @transform_3, window_bounds = array<i64: 32, 32>}, {pipeline_mode = #tpu.pipeline_mode<synchronous>, transform_indices = @transform_4, window_bounds = array<i64: 32, 32>}, {transform_indices = @transform_5, window_bounds = array<i64: 1, 8, 32>}]} {
    %c0 = arith.constant 0 : index
    %c0_0 = arith.constant 0 : index
    %c0_1 = arith.constant 0 : index
    %0 = vector.load %arg2[%c0, %c0_0, %c0_1] : memref<1x8x32xf32, #tpu.memory_space<vmem>>, vector<1x8x32xf32>
    %1 = vector.shape_cast %0 : vector<1x8x32xf32> to vector<8x32xf32>
    %c0_2 = arith.constant 0 : index
    %c0_3 = arith.constant 0 : index
    %c0_4 = arith.constant 0 : index
    %2 = vector.load %arg3[%c0_2, %c0_3, %c0_4] : memref<1x8x32xf32, #tpu.memory_space<vmem>>, vector<1x8x32xf32>
    %3 = vector.shape_cast %2 : vector<1x8x32xf32> to vector<8x32xf32>
    %c0_5 = arith.constant 0 : index
    %c0_6 = arith.constant 0 : index
    %4 = vector.load %arg4[%c0_5, %c0_6] : memref<32x32xf32, #tpu.memory_space<vmem>>, vector<32x32xf32>
    %cst = arith.constant dense<0.000000e+00> : vector<8x32xf32>
    %5 = tpu.matmul %1, %4, %cst {dimension_numbers = #tpu.dot_dimension_numbers<[1], [0], [0], [1], [0, 0, 1, 1], [], []>} : vector<8x32xf32>, vector<32x32xf32>, vector<8x32xf32> -> vector<8x32xf32>
    %cst_7 = arith.constant 2.500000e-01 : f32
    %6 = vector.broadcast %cst_7 : f32 to vector<8x32xf32>
    %7 = arith.mulf %5, %6 : vector<8x32xf32>
    %c0_8 = arith.constant 0 : index
    %c0_9 = arith.constant 0 : index
    %8 = vector.load %arg5[%c0_8, %c0_9] : memref<32x32xf32, #tpu.memory_space<vmem>>, vector<32x32xf32>
    %cst_10 = arith.constant dense<0.000000e+00> : vector<8x32xf32>
    %9 = tpu.matmul %3, %8, %cst_10 {dimension_numbers = #tpu.dot_dimension_numbers<[1], [0], [0], [1], [0, 0, 1, 1], [], []>} : vector<8x32xf32>, vector<32x32xf32>, vector<8x32xf32> -> vector<8x32xf32>
    %c0_11 = arith.constant 0 : index
    %c0_12 = arith.constant 0 : index
    %10 = vector.load %arg6[%c0_11, %c0_12] : memref<32x32xf32, #tpu.memory_space<vmem>>, vector<32x32xf32>
    %cst_13 = arith.constant dense<0.000000e+00> : vector<8x32xf32>
    %11 = tpu.matmul %3, %10, %cst_13 {dimension_numbers = #tpu.dot_dimension_numbers<[1], [0], [0], [1], [0, 0, 1, 1], [], []>} : vector<8x32xf32>, vector<32x32xf32>, vector<8x32xf32> -> vector<8x32xf32>
    %12 = vector.extract_strided_slice %7 {offsets = [0, 0], sizes = [8, 16], strides = [1, 1]} : vector<8x32xf32> to vector<8x16xf32>
    %13 = vector.extract_strided_slice %9 {offsets = [0, 0], sizes = [8, 16], strides = [1, 1]} : vector<8x32xf32> to vector<8x16xf32>
    %14 = vector.extract_strided_slice %11 {offsets = [0, 0], sizes = [8, 16], strides = [1, 1]} : vector<8x32xf32> to vector<8x16xf32>
    %cst_14 = arith.constant dense<0.000000e+00> : vector<8x8xf32>
    %15 = tpu.matmul %12, %13, %cst_14 {dimension_numbers = #tpu.dot_dimension_numbers<[1], [1], [0], [0], [0, 0, 1, 0], [], []>} : vector<8x16xf32>, vector<8x16xf32>, vector<8x8xf32> -> vector<8x8xf32>
    %cst_15 = arith.constant dense<0xFF800000> : vector<8xf32>
    %16 = vector.multi_reduction <maximumf>, %15, %cst_15 [1] : vector<8x8xf32> to vector<8xf32>
    %17 = vector.shape_cast %16 : vector<8xf32> to vector<8x1xf32>
    %18 = vector.broadcast %17 : vector<8x1xf32> to vector<8x8xf32>
    %19 = arith.subf %15, %18 : vector<8x8xf32>
    %20 = math.exp %19 : vector<8x8xf32>
    %cst_16 = arith.constant dense<0.000000e+00> : vector<8xf32>
    %21 = vector.multi_reduction <add>, %20, %cst_16 [1] : vector<8x8xf32> to vector<8xf32>
    %22 = vector.shape_cast %21 : vector<8xf32> to vector<8x1xf32>
    %cst_17 = arith.constant dense<0.000000e+00> : vector<8x16xf32>
    %23 = tpu.matmul %20, %14, %cst_17 {dimension_numbers = #tpu.dot_dimension_numbers<[1], [0], [0], [1], [0, 0, 1, 1], [], []>} : vector<8x8xf32>, vector<8x16xf32>, vector<8x16xf32> -> vector<8x16xf32>
    %24 = tpu.reciprocal %22 : vector<8x1xf32> -> vector<8x1xf32>
    %25 = vector.broadcast %24 : vector<8x1xf32> to vector<8x16xf32>
    %26 = arith.mulf %23, %25 : vector<8x16xf32>
    %27 = vector.extract_strided_slice %7 {offsets = [0, 16], sizes = [8, 16], strides = [1, 1]} : vector<8x32xf32> to vector<8x16xf32>
    %28 = vector.extract_strided_slice %9 {offsets = [0, 16], sizes = [8, 16], strides = [1, 1]} : vector<8x32xf32> to vector<8x16xf32>
    %29 = vector.extract_strided_slice %11 {offsets = [0, 16], sizes = [8, 16], strides = [1, 1]} : vector<8x32xf32> to vector<8x16xf32>
    %cst_18 = arith.constant dense<0.000000e+00> : vector<8x8xf32>
    %30 = tpu.matmul %27, %28, %cst_18 {dimension_numbers = #tpu.dot_dimension_numbers<[1], [1], [0], [0], [0, 0, 1, 0], [], []>} : vector<8x16xf32>, vector<8x16xf32>, vector<8x8xf32> -> vector<8x8xf32>
    %cst_19 = arith.constant dense<0xFF800000> : vector<8xf32>
    %31 = vector.multi_reduction <maximumf>, %30, %cst_19 [1] : vector<8x8xf32> to vector<8xf32>
    %32 = vector.shape_cast %31 : vector<8xf32> to vector<8x1xf32>
    %33 = vector.broadcast %32 : vector<8x1xf32> to vector<8x8xf32>
    %34 = arith.subf %30, %33 : vector<8x8xf32>
    %35 = math.exp %34 : vector<8x8xf32>
    %cst_20 = arith.constant dense<0.000000e+00> : vector<8xf32>
    %36 = vector.multi_reduction <add>, %35, %cst_20 [1] : vector<8x8xf32> to vector<8xf32>
    %37 = vector.shape_cast %36 : vector<8xf32> to vector<8x1xf32>
    %cst_21 = arith.constant dense<0.000000e+00> : vector<8x16xf32>
    %38 = tpu.matmul %35, %29, %cst_21 {dimension_numbers = #tpu.dot_dimension_numbers<[1], [0], [0], [1], [0, 0, 1, 1], [], []>} : vector<8x8xf32>, vector<8x16xf32>, vector<8x16xf32> -> vector<8x16xf32>
    %39 = tpu.reciprocal %37 : vector<8x1xf32> -> vector<8x1xf32>
    %40 = vector.broadcast %39 : vector<8x1xf32> to vector<8x16xf32>
    %41 = arith.mulf %38, %40 : vector<8x16xf32>
    %42 = tpu.concatenate %26, %41 in 1 : vector<8x16xf32>, vector<8x16xf32> -> vector<8x32xf32>
    %c0_22 = arith.constant 0 : index
    %c0_23 = arith.constant 0 : index
    %c0_24 = arith.constant 0 : index
    %43 = vector.load %arg7[%c0_22, %c0_23, %c0_24] : memref<1x8x32xf32, #tpu.memory_space<vmem>>, vector<1x8x32xf32>
    %44 = vector.shape_cast %43 : vector<1x8x32xf32> to vector<8x32xf32>
    %45 = vector.shape_cast %42 : vector<8x32xf32> to vector<1x8x32xf32>
    tpu.vector_store %arg7[%c0_22, %c0_23, %c0_24], %45 {strides = array<i32>} : memref<1x8x32xf32, #tpu.memory_space<vmem>>, vector<1x8x32xf32>,
    return
  }
  func.func @transform_0(%arg0: i32, %arg1: i32) -> (i32, i32, i32) {
    %c0_i32 = arith.constant 0 : i32
    %c0_i32_0 = arith.constant 0 : i32
    return %arg0, %arg1, %c0_i32 : i32, i32, i32
  }
  func.func @transform_1(%arg0: i32, %arg1: i32) -> (i32, i32, i32) {
    %c0_i32 = arith.constant 0 : i32
    %c0_i32_0 = arith.constant 0 : i32
    %c0_i32_1 = arith.constant 0 : i32
    return %arg0, %c0_i32, %c0_i32_0 : i32, i32, i32
  }
  func.func @transform_2(%arg0: i32, %arg1: i32) -> (i32, i32) {
    %c0_i32 = arith.constant 0 : i32
    %c0_i32_0 = arith.constant 0 : i32
    %c0_i32_1 = arith.constant 0 : i32
    return %c0_i32, %c0_i32_0 : i32, i32
  }
  func.func @transform_3(%arg0: i32, %arg1: i32) -> (i32, i32) {
    %c0_i32 = arith.constant 0 : i32
    %c0_i32_0 = arith.constant 0 : i32
    %c0_i32_1 = arith.constant 0 : i32
    return %c0_i32, %c0_i32_0 : i32, i32
  }
  func.func @transform_4(%arg0: i32, %arg1: i32) -> (i32, i32) {
    %c0_i32 = arith.constant 0 : i32
    %c0_i32_0 = arith.constant 0 : i32
    %c0_i32_1 = arith.constant 0 : i32
    return %c0_i32, %c0_i32_0 : i32, i32
  }
  func.func @transform_5(%arg0: i32, %arg1: i32) -> (i32, i32, i32) {
    %c0_i32 = arith.constant 0 : i32
    %c0_i32_0 = arith.constant 0 : i32
    return %arg0, %arg1, %c0_i32 : i32, i32, i32
  }
}

</mosaic_0001>

<llo_original>
// kernel: tpu_custom_call.1
$region0: #{tpu_custom_call.1}
  #allocation0 [shape = 'u32[]', space=smem, size = 0x4, offset = 0x4, fixed_abs, tag = 'smem constant byte address 0x4 - core index']
  #allocation1 [shape = 'u32[144,128]{1,0:T(1,128)}', space=vmem, size = 0x12000, scoped, tag = 'internal scratch']
  %s0 = inlined_call_operand.hbm [shape: f32[2,8,32], index: 0, kind: input, shape index: {}]
  %s1 = inlined_call_operand.hbm [shape: f32[2,8,32], index: 1, kind: input, shape index: {}]
  %s2 = inlined_call_operand.hbm [shape: f32[32,32], index: 2, kind: input, shape index: {}]
  %s3 = inlined_call_operand.hbm [shape: f32[32,32], index: 3, kind: input, shape index: {}]
  %s4 = inlined_call_operand.hbm [shape: f32[32,32], index: 4, kind: input, shape index: {}]
  %s5 = inlined_call_operand.hbm [shape: f32[2,8,32], index: 5, kind: output, shape index: {}]
  %s6 = sld [smem:[#allocation0]]
  $region73: #{tpu_custom_call.1} parent=0
    _
  %s8 = ssub.s32 1, %s6
  %s9 = scalar_select 0, %s8, %s6
  $region1: #{tpu_custom_call.1} parent=0
    #allocation2 [shape = 'u8[8192]{0}', space=vmem, size = 0x2000, scoped, tag = 'input window, operand 0']
    #allocation3 [shape = 's32[2]{0}', space=sflag, size = 0x8, scoped, tag = 'scoped memory for tpu_custom_call.1']
    #allocation4 [shape = 's32[2]{0}', space=sflag, size = 0x8, scoped, tag = 'scoped memory for tpu_custom_call.1']
    #allocation5 [shape = 'u8[8192]{0}', space=vmem, size = 0x2000, scoped, tag = 'input window, operand 1']
    #allocation6 [shape = 's32[2]{0}', space=sflag, size = 0x8, scoped, tag = 'scoped memory for tpu_custom_call.1']
    #allocation7 [shape = 'u8[16384]{0}', space=vmem, size = 0x4000, scoped, tag = 'input window, operand 2, single buffered']
    #allocation8 [shape = 'u8[16384]{0}', space=vmem, size = 0x4000, scoped, tag = 'input window, operand 3, single buffered']
    #allocation9 [shape = 's32[1]{0}', space=sflag, size = 0x4, scoped, tag = 'scoped memory for tpu_custom_call.1']
    #allocation10 [shape = 'u8[16384]{0}', space=vmem, size = 0x4000, scoped, tag = 'input window, operand 4, single buffered']
    #allocation11 [shape = 'u8[8192]{0}', space=vmem, size = 0x2000, scoped, tag = 'output window, operand 0']
    %10 = vsyncpa [#allocation3], 0
    %s11 = scalar_lea.sflag [#allocation3], 1
    %12 = vsyncpa %s11, 0
    %13 = vsyncpa [#allocation6], 0
    %s14 = scalar_lea.sflag [#allocation6], 1
    %15 = vsyncpa %s14, 0
    %16 = vsyncpa [#allocation9], 0
    %17 = vsyncpa [#allocation4], 0
    %s18 = scalar_lea.sflag [#allocation4], 1
    %19 = vsyncpa %s18, 0
    loop: start=0, step=1, limit=4
    $region2: #{tpu_custom_call.1} parent=1 // loop_pre_header
      _
    $region3: #{tpu_custom_call.1} parent=1 // loop_header
      %s21 = sphi 0, %s25
      %p22 = scmp.ge.s32.totalorder %s21, 4
      %s28 = sphi 0, %s40
      %s29 = sphi 0, %s36
      %s30 = sphi 0, %s28
      %s31 = sphi 0, %s29
      %s32 = sphi 0, %s30
      %s33 = sphi 0, %s31
      %s45 = sphi 0, %s47
      %s48 = sphi 0, %s45
      %s49 = sphi 0, %s48
      %s65 = sphi 0, %s49
      %s71 = sphi 0, %s73
      %s74 = sphi 0, %s71
      %s75 = sphi 0, %s74
      %s91 = sphi 0, %s75
      %s95 = sphi 0, %s95
      %s97 = sphi 0, %s95
      %s98 = sphi 0, %s97
      %s112 = sphi 0, %s98
      %s116 = sphi 0, %s116
      %s118 = sphi 0, %s116
      %s119 = sphi 0, %s118
      %s133 = sphi 0, %s119
      %s137 = sphi 0, %s137
      %s139 = sphi 0, %s137
      %s140 = sphi 0, %s139
      %s154 = sphi 0, %s140
      %s162 = sphi 0, %s164
      %s165 = sphi 0, %s162
      %s166 = sphi 0, %s165
      %s182 = sphi 0, %s166
    $region4: #{tpu_custom_call.1} parent=1 // loop_header_branch
      %24 = sbr.rel (%p22) target = $region8
    $region5: #{tpu_custom_call.1} parent=1 // loop_body
      %s26 = ssub.s32 %s21, 1
      %s27 = ssub.s32 %s21, 2
      %s34 = sadd.s32 1, %s29
      %p35 = scmp.ge.s32.totalorder %s34, 1
      %s36 = scalar_select %p35, 0, %s34
      %s37 = sadd.s32 1, %s28
      %s38 = scalar_select %p35, %s37, %s28
      %p39 = scmp.ge.s32.totalorder %s38, 2
      %s40 = scalar_select %p39, 0, %s38
      %s41 = ssub.s32 %s28, %s40
      %s42 = ssub.s32 %s29, %s36
      %s43 = sor.u32 %s41, %s42
      %p44 = scmp.eq.s32.totalorder %s43, 0
      %s46 = sadd.s32 %s45, 1
      %s47 = scalar_select %p44, %s45, %s46
      %p50 = pneg %p44
      %p51 = scmp.eq.s32.totalorder %s21, 1
      %p52 = por %p50, %p51
      %p53 = scmp.ne.s32.totalorder %s45, %s48
      %p54 = scmp.eq.s32.totalorder %s21, 0
      %p55 = por %p53, %p54
      %p56 = scmp.ne.s32.totalorder %s45, %s48
      %p57 = scmp.eq.s32.totalorder %s26, 1
      %p58 = por %p56, %p57
      %p59 = scmp.ne.s32.totalorder %s48, %s49
      %p60 = scmp.eq.s32.totalorder %s26, 0
      %p61 = por %p59, %p60
      %p62 = scmp.ne.s32.totalorder %s48, %s49
      %p63 = scmp.eq.s32.totalorder %s27, 1
      %p64 = por %p62, %p63
      %p66 = scmp.ne.s32.totalorder %s49, %s65
      %p67 = scmp.eq.s32.totalorder %s27, 0
      %p68 = por %p66, %p67
      %s69 = ssub.s32 %s28, %s40
      %p70 = scmp.eq.s32.totalorder %s69, 0
      %s72 = sadd.s32 %s71, 1
      %s73 = scalar_select %p70, %s71, %s72
      %p76 = pneg %p70
      %p77 = scmp.eq.s32.totalorder %s21, 1
      %p78 = por %p76, %p77
      %p79 = scmp.ne.s32.totalorder %s71, %s74
      %p80 = scmp.eq.s32.totalorder %s21, 0
      %p81 = por %p79, %p80
      %p82 = scmp.ne.s32.totalorder %s71, %s74
      %p83 = scmp.eq.s32.totalorder %s26, 1
      %p84 = por %p82, %p83
      %p85 = scmp.ne.s32.totalorder %s74, %s75
      %p86 = scmp.eq.s32.totalorder %s26, 0
      %p87 = por %p85, %p86
      %p88 = scmp.ne.s32.totalorder %s74, %s75
      %p89 = scmp.eq.s32.totalorder %s27, 1
      %p90 = por %p88, %p89
      %p92 = scmp.ne.s32.totalorder %s75, %s91
      %p93 = scmp.eq.s32.totalorder %s27, 0
      %p94 = por %p92, %p93
      %s96 = sadd.s32 %s95, 1
      %p99 = scmp.eq.s32.totalorder %s21, 1
      %p100 = scmp.ne.s32.totalorder %s95, %s97
      %p101 = scmp.eq.s32.totalorder %s21, 0
      %p102 = por %p100, %p101
      %p103 = scmp.ne.s32.totalorder %s95, %s97
      %p104 = scmp.eq.s32.totalorder %s26, 1
      %p105 = por %p103, %p104
      %p106 = scmp.ne.s32.totalorder %s97, %s98
      %p107 = scmp.eq.s32.totalorder %s26, 0
      %p108 = por %p106, %p107
      %p109 = scmp.ne.s32.totalorder %s97, %s98
      %p110 = scmp.eq.s32.totalorder %s27, 1
      %p111 = por %p109, %p110
      %p113 = scmp.ne.s32.totalorder %s98, %s112
      %p114 = scmp.eq.s32.totalorder %s27, 0
      %p115 = por %p113, %p114
      %s117 = sadd.s32 %s116, 1
      %p120 = scmp.eq.s32.totalorder %s21, 1
      %p121 = scmp.ne.s32.totalorder %s116, %s118
      %p122 = scmp.eq.s32.totalorder %s21, 0
      %p123 = por %p121, %p122
      %p124 = scmp.ne.s32.totalorder %s116, %s118
      %p125 = scmp.eq.s32.totalorder %s26, 1
      %p126 = por %p124, %p125
      %p127 = scmp.ne.s32.totalorder %s118, %s119
      %p128 = scmp.eq.s32.totalorder %s26, 0
      %p129 = por %p127, %p128
      %p130 = scmp.ne.s32.totalorder %s118, %s119
      %p131 = scmp.eq.s32.totalorder %s27, 1
      %p132 = por %p130, %p131
      %p134 = scmp.ne.s32.totalorder %s119, %s133
      %p135 = scmp.eq.s32.totalorder %s27, 0
      %p136 = por %p134, %p135
      %s138 = sadd.s32 %s137, 1
      %p141 = scmp.eq.s32.totalorder %s21, 1
      %p142 = scmp.ne.s32.totalorder %s137, %s139
      %p143 = scmp.eq.s32.totalorder %s21, 0
      %p144 = por %p142, %p143
      %p145 = scmp.ne.s32.totalorder %s137, %s139
      %p146 = scmp.eq.s32.totalorder %s26, 1
      %p147 = por %p145, %p146
      %p148 = scmp.ne.s32.totalorder %s139, %s140
      %p149 = scmp.eq.s32.totalorder %s26, 0
      %p150 = por %p148, %p149
      %p151 = scmp.ne.s32.totalorder %s139, %s140
      %p152 = scmp.eq.s32.totalorder %s27, 1
      %p153 = por %p151, %p152
      %p155 = scmp.ne.s32.totalorder %s140, %s154
      %p156 = scmp.eq.s32.totalorder %s27, 0
      %p157 = por %p155, %p156
      %s158 = ssub.s32 %s28, %s40
      %s159 = ssub.s32 %s29, %s36
      %s160 = sor.u32 %s158, %s159
      %p161 = scmp.eq.s32.totalorder %s160, 0
      %s163 = sadd.s32 %s162, 1
      %s164 = scalar_select %p161, %s162, %s163
      %p167 = pneg %p161
      %p168 = scmp.eq.s32.totalorder %s21, 1
      %p169 = por %p167, %p168
      %p170 = scmp.ne.s32.totalorder %s162, %s165
      %p171 = scmp.eq.s32.totalorder %s21, 0
      %p172 = por %p170, %p171
      %p173 = scmp.ne.s32.totalorder %s162, %s165
      %p174 = scmp.eq.s32.totalorder %s26, 1
      %p175 = por %p173, %p174
      %p176 = scmp.ne.s32.totalorder %s165, %s166
      %p177 = scmp.eq.s32.totalorder %s26, 0
      %p178 = por %p176, %p177
      %p179 = scmp.ne.s32.totalorder %s165, %s166
      %p180 = scmp.eq.s32.totalorder %s27, 1
      %p181 = por %p179, %p180
      %p183 = scmp.ne.s32.totalorder %s166, %s182
      %p184 = scmp.eq.s32.totalorder %s27, 0
      %p185 = por %p183, %p184
      %p186 = scmp.le.s32.totalorder 1, %s21
      %p187 = scmp.lt.s32.totalorder %s21, 3
      %p188 = pnand %p186, %p187
      %p189 = pneg %p188
      // Predicated region
      $region9: #{tpu_custom_call.1} parent=5 // pred_check
        _
      $region10: #{tpu_custom_call.1} parent=5 // pred_check_branch
        %191 = sbr.rel (%p188) target = $region12
      $region11: #{tpu_custom_call.1} parent=5 // pred_region
        %s192 = ssub.s32 %s21, 1
        // Predicated region
        $region13: #{tpu_custom_call.1} parent=11 // pred_check
          %p193 = pneg %p108
        $region14: #{tpu_custom_call.1} parent=11 // pred_check_branch
          %195 = sbr.rel (%p193) target = $region16
        $region15: #{tpu_custom_call.1} parent=11 // pred_region
          %s197 = ssub.s32 512, 512
          %198 = vsyncadd [#allocation6], %s197
          %s199 = sshll.u32 [#allocation7], 4
          %s200 = int_to_ptr.vmem [resolvable:$true] %s199
          %205 = dma.hbm_to_vmem [thread:$0]  %s2, 512, %s200, [#allocation6], 128, 128, 8
        $region16: #{tpu_custom_call.1} parent=11 // pred_fallthru
          _
        // Predicated region
        $region17: #{tpu_custom_call.1} parent=11 // pred_check
          %p206 = pneg %p129
        $region18: #{tpu_custom_call.1} parent=11 // pred_check_branch
          %208 = sbr.rel (%p206) target = $region20
        $region19: #{tpu_custom_call.1} parent=11 // pred_region
          %s210 = ssub.s32 512, 512
          %211 = vsyncadd [#allocation9], %s210
          %s212 = sshll.u32 [#allocation8], 4
          %s213 = int_to_ptr.vmem [resolvable:$true] %s212
          %218 = dma.hbm_to_vmem [thread:$0]  %s3, 512, %s213, [#allocation9], 128, 128, 8
        $region20: #{tpu_custom_call.1} parent=11 // pred_fallthru
          _
        // Predicated region
        $region21: #{tpu_custom_call.1} parent=11 // pred_check
          %p219 = pneg %p150
        $region22: #{tpu_custom_call.1} parent=11 // pred_check_branch
          %221 = sbr.rel (%p219) target = $region24
        $region23: #{tpu_custom_call.1} parent=11 // pred_region
          %s223 = ssub.s32 512, 512
          %224 = vsyncadd [#allocation9], %s223
          %s225 = sshll.u32 [#allocation10], 4
          %s226 = int_to_ptr.vmem [resolvable:$true] %s225
          %231 = dma.hbm_to_vmem [thread:$0]  %s4, 512, %s226, [#allocation9], 128, 128, 8
        $region24: #{tpu_custom_call.1} parent=11 // pred_fallthru
          _
      $region12: #{tpu_custom_call.1} parent=5 // pred_fallthru
        _
      %p232 = scmp.lt.s32.totalorder %s21, 2
      // Predicated region
      $region25: #{tpu_custom_call.1} parent=5 // pred_check
        %p233 = pneg %p232
      $region26: #{tpu_custom_call.1} parent=5 // pred_check_branch
        %235 = sbr.rel (%p233) target = $region28
      $region27: #{tpu_custom_call.1} parent=5 // pred_region
        // Predicated region
        $region29: #{tpu_custom_call.1} parent=27 // pred_check
          %p236 = pneg %p55
        $region30: #{tpu_custom_call.1} parent=27 // pred_check_branch
          %238 = sbr.rel (%p236) target = $region32
        $region31: #{tpu_custom_call.1} parent=27 // pred_region
          %s239 = sand.u32 %s45, 1
          %s240 = scalar_lea.sflag [#allocation3], %s239
          %s241 = sand.u32 %s45, 1
          %s242 = smul.addr %s241, 8
          %s243 = scalar_lea.vmem [#allocation2], %s242
          %s245 = ssub.s32 128, 128
          %246 = vsyncadd %s240, %s245
          %s247 = sadd.s32 %s29, %s28
          %s248 = smul.addr %s247, 128
          %s249 = scalar_lea.hbm %s0, %s248
          %s251 = sshll.u32 %s243, 4
          %s252 = int_to_ptr.vmem [resolvable:$true] %s251
          %254 = dma.hbm_to_vmem [thread:$0]  %s249, 128, %s252, %s240
        $region32: #{tpu_custom_call.1} parent=27 // pred_fallthru
          _
        // Predicated region
        $region33: #{tpu_custom_call.1} parent=27 // pred_check
          %p255 = pneg %p81
        $region34: #{tpu_custom_call.1} parent=27 // pred_check_branch
          %257 = sbr.rel (%p255) target = $region36
        $region35: #{tpu_custom_call.1} parent=27 // pred_region
          %s258 = sand.u32 %s21, 1
          %s259 = scalar_lea.sflag [#allocation6], %s258
          %s260 = sand.u32 %s71, 1
          %s261 = smul.addr %s260, 8
          %s262 = scalar_lea.vmem [#allocation5], %s261
          %s264 = ssub.s32 128, 128
          %265 = vsyncadd %s259, %s264
          %s266 = smul.addr %s28, 128
          %s267 = scalar_lea.hbm %s1, %s266
          %s269 = sshll.u32 %s262, 4
          %s270 = int_to_ptr.vmem [resolvable:$true] %s269
          %272 = dma.hbm_to_vmem [thread:$0]  %s267, 128, %s270, %s259
        $region36: #{tpu_custom_call.1} parent=27 // pred_fallthru
          _
      $region28: #{tpu_custom_call.1} parent=5 // pred_fallthru
        _
      %p273 = scmp.le.s32.totalorder 1, %s21
      %p274 = scmp.lt.s32.totalorder %s21, 3
      %p275 = pnand %p273, %p274
      %p276 = pneg %p275
      // Predicated region
      $region37: #{tpu_custom_call.1} parent=5 // pred_check
        _
      $region38: #{tpu_custom_call.1} parent=5 // pred_check_branch
        %278 = sbr.rel (%p275) target = $region40
      $region39: #{tpu_custom_call.1} parent=5 // pred_region
        %s279 = ssub.s32 %s21, 1
        %s280 = sand.u32 %s48, 1
        %s281 = scalar_lea.sflag [#allocation3], %s280
        %s282 = sand.u32 %s48, 1
        %s283 = smul.addr %s282, 8
        %s284 = scalar_lea.vmem [#allocation2], %s283
        // Predicated region
        $region41: #{tpu_custom_call.1} parent=39 // pred_check
          %p285 = pneg %p61
        $region42: #{tpu_custom_call.1} parent=39 // pred_check_branch
          %287 = sbr.rel (%p285) target = $region44
        $region43: #{tpu_custom_call.1} parent=39 // pred_region
          %288 = dma.done %s281, 128
        $region44: #{tpu_custom_call.1} parent=39 // pred_fallthru
          _
        %s289 = sand.u32 %s26, 1
        %s290 = scalar_lea.sflag [#allocation6], %s289
        %s291 = sand.u32 %s74, 1
        %s292 = smul.addr %s291, 8
        %s293 = scalar_lea.vmem [#allocation5], %s292
        // Predicated region
        $region45: #{tpu_custom_call.1} parent=39 // pred_check
          %p294 = pneg %p87
        $region46: #{tpu_custom_call.1} parent=39 // pred_check_branch
          %296 = sbr.rel (%p294) target = $region48
        $region47: #{tpu_custom_call.1} parent=39 // pred_region
          %297 = dma.done %s290, 128
        $region48: #{tpu_custom_call.1} parent=39 // pred_fallthru
          _
        // Predicated region
        $region49: #{tpu_custom_call.1} parent=39 // pred_check
          %p298 = pneg %p108
        $region50: #{tpu_custom_call.1} parent=39 // pred_check_branch
          %300 = sbr.rel (%p298) target = $region52
        $region51: #{tpu_custom_call.1} parent=39 // pred_region
          %301 = dma.done [#allocation6], 512
        $region52: #{tpu_custom_call.1} parent=39 // pred_fallthru
          _
        // Predicated region
        $region53: #{tpu_custom_call.1} parent=39 // pred_check
          %p302 = pneg %p129
        $region54: #{tpu_custom_call.1} parent=39 // pred_check_branch
          %304 = sbr.rel (%p302) target = $region56
        $region55: #{tpu_custom_call.1} parent=39 // pred_region
          %305 = dma.done [#allocation9], 512
        $region56: #{tpu_custom_call.1} parent=39 // pred_fallthru
          _
        // Predicated region
        $region57: #{tpu_custom_call.1} parent=39 // pred_check
          %p306 = pneg %p150
        $region58: #{tpu_custom_call.1} parent=39 // pred_check_branch
          %308 = sbr.rel (%p306) target = $region60
        $region59: #{tpu_custom_call.1} parent=39 // pred_region
          %309 = dma.done [#allocation9], 512
        $region60: #{tpu_custom_call.1} parent=39 // pred_fallthru
          _
        %s310 = sand.u32 %s48, 1
        %s311 = scalar_lea.sflag [#allocation3], %s310
        %s312 = sand.u32 %s48, 1
        %s313 = smul.addr %s312, 8
        %s314 = scalar_lea.vmem [#allocation2], %s313
        %p315 = pneg %p61
        %p316 = pneg %p58
        %s317 = sand.u32 %s26, 1
        %s318 = scalar_lea.sflag [#allocation6], %s317
        %s319 = sand.u32 %s74, 1
        %s320 = smul.addr %s319, 8
        %s321 = scalar_lea.vmem [#allocation5], %s320
        %p322 = pneg %p87
        %p323 = pneg %p84
        %p324 = pneg %p108
        %p325 = pneg %p105
        %p326 = pneg %p129
        %p327 = pneg %p126
        %p328 = pneg %p150
        %p329 = pneg %p147
        %p330 = pneg %p178
        %p331 = pneg %p175
        %s332 = sand.u32 %s165, 1
        %s333 = scalar_lea.sflag [#allocation4], %s332
        %s334 = sand.u32 %s165, 1
        %s335 = smul.addr %s334, 8
        %s336 = scalar_lea.vmem [#allocation11], %s335
        %v337 = vld [vmem:[%s284] sm:$0xff]
        %v338 = vld [vmem:[%s293] sm:$0xff]
        %v339 = vld [vmem:[#allocation7] sm:$0xff]
        %v340 = vld [vmem:[#allocation7 + $0x8] sm:$0xff]
        %v341 = vld [vmem:[#allocation7 + $0x10] sm:$0xff]
        %v342 = vld [vmem:[#allocation7 + $0x18] sm:$0xff]
        %vm343 = vcmask 261120
        %v345 = vsel %vm343, %v337, 0
        %347 = vmatprep.subr.mxu0 0.0
        %348 = vmatpush1.msra.mxu0 %v339
        %349 = vmatprep.subr.mxu0 0.0
        %350 = vmatpush1.msra.mxu0 %v340
        %351 = vmatprep.subr.mxu0 0.0
        %352 = vmatpush1.msra.mxu0 %v341
        %353 = vmatprep.subr.mxu0 0.0
        %354 = vmatpush1.msra.mxu0 %v342
        %355 = vmatprep.subr.mxu0 0.0
        %356 = vmatpush1.msra.mxu0 0.0
        %357 = vmatprep.subr.mxu0 0.0
        %358 = vmatpush1.msra.mxu0 0.0
        %359 = vmatprep.subr.mxu0 0.0
        %360 = vmatpush1.msra.mxu0 0.0
        %361 = vmatprep.subr.mxu0 0.0
        %362 = vmatpush1.msra.mxu0 0.0
        %363 = vmatprep.subr.mxu0 0.0
        %364 = vmatpush1.msra.mxu0 0.0
        %365 = vmatprep.subr.mxu0 0.0
        %366 = vmatpush1.msra.mxu0 0.0
        %367 = vmatprep.subr.mxu0 0.0
        %368 = vmatpush1.msra.mxu0 0.0
        %369 = vmatprep.subr.mxu0 0.0
        %370 = vmatpush1.msra.mxu0 0.0
        %371 = vmatprep.subr.mxu0 0.0
        %372 = vmatpush1.msra.mxu0 0.0
        %373 = vmatprep.subr.mxu0 0.0
        %374 = vmatpush1.msra.mxu0 0.0
        %375 = vmatprep.subr.mxu0 0.0
        %376 = vmatpush1.msra.mxu0 0.0
        %377 = vmatprep.subr.mxu0 0.0
        %378 = vmatpush1.msra.mxu0 0.0
        %379 = vmatprep.subr.mxu0 0.0
        %380 = vmatpush1.msra.mxu0 0.0
        %381 = vmatprep.subr.mxu0 0.0
        %382 = vmatpush1.msra.mxu0 0.0
        %383 = vmatprep.subr.mxu0 0.0
        %384 = vmatpush1.msra.mxu0 0.0
        %385 = vmatprep.subr.mxu0 0.0
        %386 = vmatpush1.msra.mxu0 0.0
        %387 = vmatprep.subr.mxu0 0.0
        %388 = vmatpush1.msra.mxu0 0.0
        %389 = vmatprep.subr.mxu0 0.0
        %390 = vmatpush1.msra.mxu0 0.0
        %391 = vmatprep.subr.mxu0 0.0
        %392 = vmatpush1.msra.mxu0 0.0
        %393 = vmatprep.subr.mxu0 0.0
        %394 = vmatpush1.msra.mxu0 0.0
        %395 = vmatprep.subr.mxu0 0.0
        %396 = vmatpush1.msra.mxu0 0.0
        %397 = vmatprep.subr.mxu0 0.0
        %398 = vmatpush1.msra.mxu0 0.0
        %399 = vmatprep.subr.mxu0 0.0
        %400 = vmatpush1.msra.mxu0 0.0
        %401 = vmatprep.subr.mxu0 0.0
        %402 = vmatpush1.msra.mxu0 0.0
        %403 = vmatprep.subr.mxu0 0.0
        %404 = vmatpush1.msra.mxu0 0.0
        %405 = vmatprep.subr.mxu0 0.0
        %406 = vmatpush1.msra.mxu0 0.0
        %407 = vmatprep.subr.mxu0 0.0
        %408 = vmatpush1.msra.mxu0 0.0
        %409 = vmatprep.subr.mxu0 0.0
        %410 = vmatpush1.msra.mxu0 0.0
        %411 = vmatprep.mubr.f32.mxu0 0.0
        %412 = vmatmul.mubr.f32.gmra.mrb[0].mxu0 %v345
        %v413 = vpop.f32.mrb[0].mxu0
        %v414 = vadd.f32 0.0, %v413
        %v415 = vpop.f32.mrb[0].mxu0
        %416 = vdwg.mxu0
        %v417 = vmul.f32 %v414, 0.25
        %v418 = vld [vmem:[#allocation8] sm:$0xff]
        %v419 = vld [vmem:[#allocation8 + $0x8] sm:$0xff]
        %v420 = vld [vmem:[#allocation8 + $0x10] sm:$0xff]
        %v421 = vld [vmem:[#allocation8 + $0x18] sm:$0xff]
        %v423 = vsel %vm343, %v338, 0
        %425 = vmatprep.subr.mxu0 0.0
        %426 = vmatpush1.msra.mxu0 %v418
        %427 = vmatprep.subr.mxu0 0.0
        %428 = vmatpush1.msra.mxu0 %v419
        %429 = vmatprep.subr.mxu0 0.0
        %430 = vmatpush1.msra.mxu0 %v420
        %431 = vmatprep.subr.mxu0 0.0
        %432 = vmatpush1.msra.mxu0 %v421
        %433 = vmatprep.subr.mxu0 0.0
        %434 = vmatpush1.msra.mxu0 0.0
        %435 = vmatprep.subr.mxu0 0.0
        %436 = vmatpush1.msra.mxu0 0.0
        %437 = vmatprep.subr.mxu0 0.0
        %438 = vmatpush1.msra.mxu0 0.0
        %439 = vmatprep.subr.mxu0 0.0
        %440 = vmatpush1.msra.mxu0 0.0
        %441 = vmatprep.subr.mxu0 0.0
        %442 = vmatpush1.msra.mxu0 0.0
        %443 = vmatprep.subr.mxu0 0.0
        %444 = vmatpush1.msra.mxu0 0.0
        %445 = vmatprep.subr.mxu0 0.0
        %446 = vmatpush1.msra.mxu0 0.0
        %447 = vmatprep.subr.mxu0 0.0
        %448 = vmatpush1.msra.mxu0 0.0
        %449 = vmatprep.subr.mxu0 0.0
        %450 = vmatpush1.msra.mxu0 0.0
        %451 = vmatprep.subr.mxu0 0.0
        %452 = vmatpush1.msra.mxu0 0.0
        %453 = vmatprep.subr.mxu0 0.0
        %454 = vmatpush1.msra.mxu0 0.0
        %455 = vmatprep.subr.mxu0 0.0
        %456 = vmatpush1.msra.mxu0 0.0
        %457 = vmatprep.subr.mxu0 0.0
        %458 = vmatpush1.msra.mxu0 0.0
        %459 = vmatprep.subr.mxu0 0.0
        %460 = vmatpush1.msra.mxu0 0.0
        %461 = vmatprep.subr.mxu0 0.0
        %462 = vmatpush1.msra.mxu0 0.0
        %463 = vmatprep.subr.mxu0 0.0
        %464 = vmatpush1.msra.mxu0 0.0
        %465 = vmatprep.subr.mxu0 0.0
        %466 = vmatpush1.msra.mxu0 0.0
        %467 = vmatprep.subr.mxu0 0.0
        %468 = vmatpush1.msra.mxu0 0.0
        %469 = vmatprep.subr.mxu0 0.0
        %470 = vmatpush1.msra.mxu0 0.0
        %471 = vmatprep.subr.mxu0 0.0
        %472 = vmatpush1.msra.mxu0 0.0
        %473 = vmatprep.subr.mxu0 0.0
        %474 = vmatpush1.msra.mxu0 0.0
        %475 = vmatprep.subr.mxu0 0.0
        %476 = vmatpush1.msra.mxu0 0.0
        %477 = vmatprep.subr.mxu0 0.0
        %478 = vmatpush1.msra.mxu0 0.0
        %479 = vmatprep.subr.mxu0 0.0
        %480 = vmatpush1.msra.mxu0 0.0
        %481 = vmatprep.subr.mxu0 0.0
        %482 = vmatpush1.msra.mxu0 0.0
        %483 = vmatprep.subr.mxu0 0.0
        %484 = vmatpush1.msra.mxu0 0.0
        %485 = vmatprep.subr.mxu0 0.0
        %486 = vmatpush1.msra.mxu0 0.0
        %487 = vmatprep.subr.mxu0 0.0
        %488 = vmatpush1.msra.mxu0 0.0
        %489 = vmatprep.mubr.f32.mxu0 0.0
        %490 = vmatmul.mubr.f32.gmra.mrb[0].mxu0 %v423
        %v491 = vpop.f32.mrb[0].mxu0
        %v492 = vadd.f32 0.0, %v491
        %v493 = vpop.f32.mrb[0].mxu0
        %494 = vdwg.mxu0
        %v495 = vld [vmem:[#allocation10] sm:$0xff]
        %v496 = vld [vmem:[#allocation10 + $0x8] sm:$0xff]
        %v497 = vld [vmem:[#allocation10 + $0x10] sm:$0xff]
        %v498 = vld [vmem:[#allocation10 + $0x18] sm:$0xff]
        %499 = vmatprep.subr.mxu0 0.0
        %500 = vmatpush1.msra.mxu0 %v495
        %501 = vmatprep.subr.mxu0 0.0
        %502 = vmatpush1.msra.mxu0 %v496
        %503 = vmatprep.subr.mxu0 0.0
        %504 = vmatpush1.msra.mxu0 %v497
        %505 = vmatprep.subr.mxu0 0.0
        %506 = vmatpush1.msra.mxu0 %v498
        %507 = vmatprep.subr.mxu0 0.0
        %508 = vmatpush1.msra.mxu0 0.0
        %509 = vmatprep.subr.mxu0 0.0
        %510 = vmatpush1.msra.mxu0 0.0
        %511 = vmatprep.subr.mxu0 0.0
        %512 = vmatpush1.msra.mxu0 0.0
        %513 = vmatprep.subr.mxu0 0.0
        %514 = vmatpush1.msra.mxu0 0.0
        %515 = vmatprep.subr.mxu0 0.0
        %516 = vmatpush1.msra.mxu0 0.0
        %517 = vmatprep.subr.mxu0 0.0
        %518 = vmatpush1.msra.mxu0 0.0
        %519 = vmatprep.subr.mxu0 0.0
        %520 = vmatpush1.msra.mxu0 0.0
        %521 = vmatprep.subr.mxu0 0.0
        %522 = vmatpush1.msra.mxu0 0.0
        %523 = vmatprep.subr.mxu0 0.0
        %524 = vmatpush1.msra.mxu0 0.0
        %525 = vmatprep.subr.mxu0 0.0
        %526 = vmatpush1.msra.mxu0 0.0
        %527 = vmatprep.subr.mxu0 0.0
        %528 = vmatpush1.msra.mxu0 0.0
        %529 = vmatprep.subr.mxu0 0.0
        %530 = vmatpush1.msra.mxu0 0.0
        %531 = vmatprep.subr.mxu0 0.0
        %532 = vmatpush1.msra.mxu0 0.0
        %533 = vmatprep.subr.mxu0 0.0
        %534 = vmatpush1.msra.mxu0 0.0
        %535 = vmatprep.subr.mxu0 0.0
        %536 = vmatpush1.msra.mxu0 0.0
        %537 = vmatprep.subr.mxu0 0.0
        %538 = vmatpush1.msra.mxu0 0.0
        %539 = vmatprep.subr.mxu0 0.0
        %540 = vmatpush1.msra.mxu0 0.0
        %541 = vmatprep.subr.mxu0 0.0
        %542 = vmatpush1.msra.mxu0 0.0
        %543 = vmatprep.subr.mxu0 0.0
        %544 = vmatpush1.msra.mxu0 0.0
        %545 = vmatprep.subr.mxu0 0.0
        %546 = vmatpush1.msra.mxu0 0.0
        %547 = vmatprep.subr.mxu0 0.0
        %548 = vmatpush1.msra.mxu0 0.0
        %549 = vmatprep.subr.mxu0 0.0
        %550 = vmatpush1.msra.mxu0 0.0
        %551 = vmatprep.subr.mxu0 0.0
        %552 = vmatpush1.msra.mxu0 0.0
        %553 = vmatprep.subr.mxu0 0.0
        %554 = vmatpush1.msra.mxu0 0.0
        %555 = vmatprep.subr.mxu0 0.0
        %556 = vmatpush1.msra.mxu0 0.0
        %557 = vmatprep.subr.mxu0 0.0
        %558 = vmatpush1.msra.mxu0 0.0
        %559 = vmatprep.subr.mxu0 0.0
        %560 = vmatpush1.msra.mxu0 0.0
        %561 = vmatprep.subr.mxu0 0.0
        %562 = vmatpush1.msra.mxu0 0.0
        %563 = vmatprep.mubr.f32.mxu0 0.0
        %564 = vmatmul.mubr.f32.gmra.mrb[0].mxu0 %v423
        %v565 = vpop.f32.mrb[0].mxu0
        %v566 = vadd.f32 0.0, %v565
        %v567 = vpop.f32.mrb[0].mxu0
        %568 = vdwg.mxu0
        %vm569 = vcmask 130048
        %v571 = vsel %vm569, %v417, 0
        %v574 = vsel %vm569, %v492, 0
        %576 = vmatprep.subr.mxu0 0.0
        %577 = vmatpush1.xpose.msra.mxu0 %v574
        %578 = vmatprep.subr.mxu0 0.0
        %579 = vmatpush1.xpose.msra.mxu0 0.0
        %580 = vmatprep.subr.mxu0 0.0
        %581 = vmatpush1.xpose.msra.mxu0 0.0
        %582 = vmatprep.subr.mxu0 0.0
        %583 = vmatpush1.xpose.msra.mxu0 0.0
        %584 = vmatprep.subr.mxu0 0.0
        %585 = vmatpush1.xpose.msra.mxu0 0.0
        %586 = vmatprep.subr.mxu0 0.0
        %587 = vmatpush1.xpose.msra.mxu0 0.0
        %588 = vmatprep.subr.mxu0 0.0
        %589 = vmatpush1.xpose.msra.mxu0 0.0
        %590 = vmatprep.subr.mxu0 0.0
        %591 = vmatpush1.xpose.msra.mxu0 0.0
        %592 = vmatprep.subr.mxu0 0.0
        %593 = vmatpush1.xpose.msra.mxu0 0.0
        %594 = vmatprep.subr.mxu0 0.0
        %595 = vmatpush1.xpose.msra.mxu0 0.0
        %596 = vmatprep.subr.mxu0 0.0
        %597 = vmatpush1.xpose.msra.mxu0 0.0
        %598 = vmatprep.subr.mxu0 0.0
        %599 = vmatpush1.xpose.msra.mxu0 0.0
        %600 = vmatprep.subr.mxu0 0.0
        %601 = vmatpush1.xpose.msra.mxu0 0.0
        %602 = vmatprep.subr.mxu0 0.0
        %603 = vmatpush1.xpose.msra.mxu0 0.0
        %604 = vmatprep.subr.mxu0 0.0
        %605 = vmatpush1.xpose.msra.mxu0 0.0
        %606 = vmatprep.subr.mxu0 0.0
        %607 = vmatpush1.xpose.msra.mxu0 0.0
        %608 = vmatprep.subr.mxu0 0.0
        %609 = vmatpush1.xpose.msra.mxu0 0.0
        %610 = vmatprep.subr.mxu0 0.0
        %611 = vmatpush1.xpose.msra.mxu0 0.0
        %612 = vmatprep.subr.mxu0 0.0
        %613 = vmatpush1.xpose.msra.mxu0 0.0
        %614 = vmatprep.subr.mxu0 0.0
        %615 = vmatpush1.xpose.msra.mxu0 0.0
        %616 = vmatprep.subr.mxu0 0.0
        %617 = vmatpush1.xpose.msra.mxu0 0.0
        %618 = vmatprep.subr.mxu0 0.0
        %619 = vmatpush1.xpose.msra.mxu0 0.0
        %620 = vmatprep.subr.mxu0 0.0
        %621 = vmatpush1.xpose.msra.mxu0 0.0
        %622 = vmatprep.subr.mxu0 0.0
        %623 = vmatpush1.xpose.msra.mxu0 0.0
        %624 = vmatprep.subr.mxu0 0.0
        %625 = vmatpush1.xpose.msra.mxu0 0.0
        %626 = vmatprep.subr.mxu0 0.0
        %627 = vmatpush1.xpose.msra.mxu0 0.0
        %628 = vmatprep.subr.mxu0 0.0
        %629 = vmatpush1.xpose.msra.mxu0 0.0
        %630 = vmatprep.subr.mxu0 0.0
        %631 = vmatpush1.xpose.msra.mxu0 0.0
        %632 = vmatprep.subr.mxu0 0.0
        %633 = vmatpush1.xpose.msra.mxu0 0.0
        %634 = vmatprep.subr.mxu0 0.0
        %635 = vmatpush1.xpose.msra.mxu0 0.0
        %636 = vmatprep.subr.mxu0 0.0
        %637 = vmatpush1.xpose.msra.mxu0 0.0
        %638 = vmatprep.subr.mxu0 0.0
        %639 = vmatpush1.xpose.msra.mxu0 0.0
        %640 = vmatprep.mubr.f32.mxu0 0.0
        %641 = vmatmul.mubr.f32.gmra.mrb[0].mxu0 %v571
        %v642 = vpop.f32.mrb[0].mxu0
        %v643 = vadd.f32 0.0, %v642
        %v644 = vpop.f32.mrb[0].mxu0
        %645 = vdwg.mxu0
        %vm646 = vcmask 64512
        %v647 = vsel %vm646, %v643, -inf
        %648 = vmax.xlane.f32.xlu0 %v647
        %v649 = vpop.xlane.xlu0 %648
        %v650 = vsub.f32 %v643, %v649
        %v651 = vmul.f32 %v650, 1.442695
        %v652 = vpow.pop %v651
        %v653 = vsel %vm646, %v652, 0.0
        %654 = vadd.xlane.f32.xlu0 %v653
        %v655 = vpop.xlane.xlu0 %654
        %v657 = vsel %vm646, %v652, 0
        %659 = vmatprep.subr.mxu0 0.0
        %660 = vmatpush1.msra.mxu0 %v566
        %661 = vmatprep.subr.mxu0 0.0
        %662 = vmatpush1.msra.mxu0 0.0
        %663 = vmatprep.subr.mxu0 0.0
        %664 = vmatpush1.msra.mxu0 0.0
        %665 = vmatprep.subr.mxu0 0.0
        %666 = vmatpush1.msra.mxu0 0.0
        %667 = vmatprep.subr.mxu0 0.0
        %668 = vmatpush1.msra.mxu0 0.0
        %669 = vmatprep.subr.mxu0 0.0
        %670 = vmatpush1.msra.mxu0 0.0
        %671 = vmatprep.subr.mxu0 0.0
        %672 = vmatpush1.msra.mxu0 0.0
        %673 = vmatprep.subr.mxu0 0.0
        %674 = vmatpush1.msra.mxu0 0.0
        %675 = vmatprep.subr.mxu0 0.0
        %676 = vmatpush1.msra.mxu0 0.0
        %677 = vmatprep.subr.mxu0 0.0
        %678 = vmatpush1.msra.mxu0 0.0
        %679 = vmatprep.subr.mxu0 0.0
        %680 = vmatpush1.msra.mxu0 0.0
        %681 = vmatprep.subr.mxu0 0.0
        %682 = vmatpush1.msra.mxu0 0.0
        %683 = vmatprep.subr.mxu0 0.0
        %684 = vmatpush1.msra.mxu0 0.0
        %685 = vmatprep.subr.mxu0 0.0
        %686 = vmatpush1.msra.mxu0 0.0
        %687 = vmatprep.subr.mxu0 0.0
        %688 = vmatpush1.msra.mxu0 0.0
        %689 = vmatprep.subr.mxu0 0.0
        %690 = vmatpush1.msra.mxu0 0.0
        %691 = vmatprep.subr.mxu0 0.0
        %692 = vmatpush1.msra.mxu0 0.0
        %693 = vmatprep.subr.mxu0 0.0
        %694 = vmatpush1.msra.mxu0 0.0
        %695 = vmatprep.subr.mxu0 0.0
        %696 = vmatpush1.msra.mxu0 0.0
        %697 = vmatprep.subr.mxu0 0.0
        %698 = vmatpush1.msra.mxu0 0.0
        %699 = vmatprep.subr.mxu0 0.0
        %700 = vmatpush1.msra.mxu0 0.0
        %701 = vmatprep.subr.mxu0 0.0
        %702 = vmatpush1.msra.mxu0 0.0
        %703 = vmatprep.subr.mxu0 0.0
        %704 = vmatpush1.msra.mxu0 0.0
        %705 = vmatprep.subr.mxu0 0.0
        %706 = vmatpush1.msra.mxu0 0.0
        %707 = vmatprep.subr.mxu0 0.0
        %708 = vmatpush1.msra.mxu0 0.0
        %709 = vmatprep.subr.mxu0 0.0
        %710 = vmatpush1.msra.mxu0 0.0
        %711 = vmatprep.subr.mxu0 0.0
        %712 = vmatpush1.msra.mxu0 0.0
        %713 = vmatprep.subr.mxu0 0.0
        %714 = vmatpush1.msra.mxu0 0.0
        %715 = vmatprep.subr.mxu0 0.0
        %716 = vmatpush1.msra.mxu0 0.0
        %717 = vmatprep.subr.mxu0 0.0
        %718 = vmatpush1.msra.mxu0 0.0
        %719 = vmatprep.subr.mxu0 0.0
        %720 = vmatpush1.msra.mxu0 0.0
        %721 = vmatprep.subr.mxu0 0.0
        %722 = vmatpush1.msra.mxu0 0.0
        %723 = vmatprep.mubr.f32.mxu0 0.0
        %724 = vmatmul.mubr.f32.gmra.mrb[0].mxu0 %v657
        %v725 = vpop.f32.mrb[0].mxu0
        %v726 = vadd.f32 0.0, %v725
        %v727 = vpop.f32.mrb[0].mxu0
        %728 = vdwg.mxu0
        %v729 = vrcp.pop %v655
        %v730 = vmul.f32 %v726, %v729
        %731 = vrot.lane.b32.xlu0 %v417, 112
        %v732 = vpop.permute.xlu0 %731
        %733 = vrot.lane.b32.xlu0 %v492, 112
        %v734 = vpop.permute.xlu0 %733
        %v735 = vsel %vm569, %v732, 0
        %v737 = vsel %vm569, %v734, 0
        %739 = vmatprep.subr.mxu0 0.0
        %740 = vmatpush1.xpose.msra.mxu0 %v737
        %741 = vmatprep.subr.mxu0 0.0
        %742 = vmatpush1.xpose.msra.mxu0 0.0
        %743 = vmatprep.subr.mxu0 0.0
        %744 = vmatpush1.xpose.msra.mxu0 0.0
        %745 = vmatprep.subr.mxu0 0.0
        %746 = vmatpush1.xpose.msra.mxu0 0.0
        %747 = vmatprep.subr.mxu0 0.0
        %748 = vmatpush1.xpose.msra.mxu0 0.0
        %749 = vmatprep.subr.mxu0 0.0
        %750 = vmatpush1.xpose.msra.mxu0 0.0
        %751 = vmatprep.subr.mxu0 0.0
        %752 = vmatpush1.xpose.msra.mxu0 0.0
        %753 = vmatprep.subr.mxu0 0.0
        %754 = vmatpush1.xpose.msra.mxu0 0.0
        %755 = vmatprep.subr.mxu0 0.0
        %756 = vmatpush1.xpose.msra.mxu0 0.0
        %757 = vmatprep.subr.mxu0 0.0
        %758 = vmatpush1.xpose.msra.mxu0 0.0
        %759 = vmatprep.subr.mxu0 0.0
        %760 = vmatpush1.xpose.msra.mxu0 0.0
        %761 = vmatprep.subr.mxu0 0.0
        %762 = vmatpush1.xpose.msra.mxu0 0.0
        %763 = vmatprep.subr.mxu0 0.0
        %764 = vmatpush1.xpose.msra.mxu0 0.0
        %765 = vmatprep.subr.mxu0 0.0
        %766 = vmatpush1.xpose.msra.mxu0 0.0
        %767 = vmatprep.subr.mxu0 0.0
        %768 = vmatpush1.xpose.msra.mxu0 0.0
        %769 = vmatprep.subr.mxu0 0.0
        %770 = vmatpush1.xpose.msra.mxu0 0.0
        %771 = vmatprep.subr.mxu0 0.0
        %772 = vmatpush1.xpose.msra.mxu0 0.0
        %773 = vmatprep.subr.mxu0 0.0
        %774 = vmatpush1.xpose.msra.mxu0 0.0
        %775 = vmatprep.subr.mxu0 0.0
        %776 = vmatpush1.xpose.msra.mxu0 0.0
        %777 = vmatprep.subr.mxu0 0.0
        %778 = vmatpush1.xpose.msra.mxu0 0.0
        %779 = vmatprep.subr.mxu0 0.0
        %780 = vmatpush1.xpose.msra.mxu0 0.0
        %781 = vmatprep.subr.mxu0 0.0
        %782 = vmatpush1.xpose.msra.mxu0 0.0
        %783 = vmatprep.subr.mxu0 0.0
        %784 = vmatpush1.xpose.msra.mxu0 0.0
        %785 = vmatprep.subr.mxu0 0.0
        %786 = vmatpush1.xpose.msra.mxu0 0.0
        %787 = vmatprep.subr.mxu0 0.0
        %788 = vmatpush1.xpose.msra.mxu0 0.0
        %789 = vmatprep.subr.mxu0 0.0
        %790 = vmatpush1.xpose.msra.mxu0 0.0
        %791 = vmatprep.subr.mxu0 0.0
        %792 = vmatpush1.xpose.msra.mxu0 0.0
        %793 = vmatprep.subr.mxu0 0.0
        %794 = vmatpush1.xpose.msra.mxu0 0.0
        %795 = vmatprep.subr.mxu0 0.0
        %796 = vmatpush1.xpose.msra.mxu0 0.0
        %797 = vmatprep.subr.mxu0 0.0
        %798 = vmatpush1.xpose.msra.mxu0 0.0
        %799 = vmatprep.subr.mxu0 0.0
        %800 = vmatpush1.xpose.msra.mxu0 0.0
        %801 = vmatprep.subr.mxu0 0.0
        %802 = vmatpush1.xpose.msra.mxu0 0.0
        %803 = vmatprep.mubr.f32.mxu0 0.0
        %804 = vmatmul.mubr.f32.gmra.mrb[0].mxu0 %v735
        %v805 = vpop.f32.mrb[0].mxu0
        %v806 = vadd.f32 0.0, %v805
        %v807 = vpop.f32.mrb[0].mxu0
        %808 = vdwg.mxu0
        %v809 = vsel %vm646, %v806, -inf
        %810 = vmax.xlane.f32.xlu0 %v809
        %v811 = vpop.xlane.xlu0 %810
        %v812 = vsub.f32 %v806, %v811
        %v813 = vmul.f32 %v812, 1.442695
        %v814 = vpow.pop %v813
        %v815 = vsel %vm646, %v814, 0.0
        %816 = vadd.xlane.f32.xlu0 %v815
        %v817 = vpop.xlane.xlu0 %816
        %819 = vrot.lane.b32.xlu0 %v566, 112
        %v820 = vpop.permute.xlu0 %819
        %v823 = vsel %vm646, %v814, 0
        %825 = vmatprep.subr.mxu0 0.0
        %826 = vmatpush1.msra.mxu0 %v820
        %827 = vmatprep.subr.mxu0 0.0
        %828 = vmatpush1.msra.mxu0 0.0
        %829 = vmatprep.subr.mxu0 0.0
        %830 = vmatpush1.msra.mxu0 0.0
        %831 = vmatprep.subr.mxu0 0.0
        %832 = vmatpush1.msra.mxu0 0.0
        %833 = vmatprep.subr.mxu0 0.0
        %834 = vmatpush1.msra.mxu0 0.0
        %835 = vmatprep.subr.mxu0 0.0
        %836 = vmatpush1.msra.mxu0 0.0
        %837 = vmatprep.subr.mxu0 0.0
        %838 = vmatpush1.msra.mxu0 0.0
        %839 = vmatprep.subr.mxu0 0.0
        %840 = vmatpush1.msra.mxu0 0.0
        %841 = vmatprep.subr.mxu0 0.0
        %842 = vmatpush1.msra.mxu0 0.0
        %843 = vmatprep.subr.mxu0 0.0
        %844 = vmatpush1.msra.mxu0 0.0
        %845 = vmatprep.subr.mxu0 0.0
        %846 = vmatpush1.msra.mxu0 0.0
        %847 = vmatprep.subr.mxu0 0.0
        %848 = vmatpush1.msra.mxu0 0.0
        %849 = vmatprep.subr.mxu0 0.0
        %850 = vmatpush1.msra.mxu0 0.0
        %851 = vmatprep.subr.mxu0 0.0
        %852 = vmatpush1.msra.mxu0 0.0
        %853 = vmatprep.subr.mxu0 0.0
        %854 = vmatpush1.msra.mxu0 0.0
        %855 = vmatprep.subr.mxu0 0.0
        %856 = vmatpush1.msra.mxu0 0.0
        %857 = vmatprep.subr.mxu0 0.0
        %858 = vmatpush1.msra.mxu0 0.0
        %859 = vmatprep.subr.mxu0 0.0
        %860 = vmatpush1.msra.mxu0 0.0
        %861 = vmatprep.subr.mxu0 0.0
        %862 = vmatpush1.msra.mxu0 0.0
        %863 = vmatprep.subr.mxu0 0.0
        %864 = vmatpush1.msra.mxu0 0.0
        %865 = vmatprep.subr.mxu0 0.0
        %866 = vmatpush1.msra.mxu0 0.0
        %867 = vmatprep.subr.mxu0 0.0
        %868 = vmatpush1.msra.mxu0 0.0
        %869 = vmatprep.subr.mxu0 0.0
        %870 = vmatpush1.msra.mxu0 0.0
        %871 = vmatprep.subr.mxu0 0.0
        %872 = vmatpush1.msra.mxu0 0.0
        %873 = vmatprep.subr.mxu0 0.0
        %874 = vmatpush1.msra.mxu0 0.0
        %875 = vmatprep.subr.mxu0 0.0
        %876 = vmatpush1.msra.mxu0 0.0
        %877 = vmatprep.subr.mxu0 0.0
        %878 = vmatpush1.msra.mxu0 0.0
        %879 = vmatprep.subr.mxu0 0.0
        %880 = vmatpush1.msra.mxu0 0.0
        %881 = vmatprep.subr.mxu0 0.0
        %882 = vmatpush1.msra.mxu0 0.0
        %883 = vmatprep.subr.mxu0 0.0
        %884 = vmatpush1.msra.mxu0 0.0
        %885 = vmatprep.subr.mxu0 0.0
        %886 = vmatpush1.msra.mxu0 0.0
        %887 = vmatprep.subr.mxu0 0.0
        %888 = vmatpush1.msra.mxu0 0.0
        %889 = vmatprep.mubr.f32.mxu0 0.0
        %890 = vmatmul.mubr.f32.gmra.mrb[0].mxu0 %v823
        %v891 = vpop.f32.mrb[0].mxu0
        %v892 = vadd.f32 0.0, %v891
        %v893 = vpop.f32.mrb[0].mxu0
        %894 = vdwg.mxu0
        %v895 = vrcp.pop %v817
        %v896 = vmul.f32 %v892, %v895
        %898 = vrot.lane.b32.xlu0 %v896, 16
        %v899 = vpop.permute.xlu0 %898
        %v901 = vsel %vm569, %v730, %v899
        %902 = vst.msk [vmem:[%s336] sm:$0xff] %vm343, %v901
        %s903 = sand.u32 %s165, 1
        %s904 = scalar_lea.sflag [#allocation4], %s903
        %s905 = sand.u32 %s165, 1
        %s906 = smul.addr %s905, 8
        %s907 = scalar_lea.vmem [#allocation11], %s906
        // Predicated region
        $region61: #{tpu_custom_call.1} parent=39 // pred_check
          %p908 = pneg %p175
        $region62: #{tpu_custom_call.1} parent=39 // pred_check_branch
          %910 = sbr.rel (%p908) target = $region64
        $region63: #{tpu_custom_call.1} parent=39 // pred_region
          %s912 = ssub.s32 128, 128
          %913 = vsyncadd %s904, %s912
          %s914 = sadd.s32 %s31, %s30
          %s915 = smul.addr %s914, 128
          %s916 = scalar_lea.hbm %s5, %s915
          %s918 = sshll.u32 %s907, 4
          %s919 = int_to_ptr.vmem [resolvable:$true] %s918
          %921 = dma.vmem_to_hbm [thread:$0]  %s919, 128, %s916, %s904
        $region64: #{tpu_custom_call.1} parent=39 // pred_fallthru
          _
      $region40: #{tpu_custom_call.1} parent=5 // pred_fallthru
        _
      %p922 = scmp.le.s32.totalorder 2, %s21
      // Predicated region
      $region65: #{tpu_custom_call.1} parent=5 // pred_check
        %p923 = pneg %p922
      $region66: #{tpu_custom_call.1} parent=5 // pred_check_branch
        %925 = sbr.rel (%p923) target = $region68
      $region67: #{tpu_custom_call.1} parent=5 // pred_region
        %s926 = ssub.s32 %s21, 2
        // Predicated region
        $region69: #{tpu_custom_call.1} parent=67 // pred_check
          %p927 = pneg %p181
        $region70: #{tpu_custom_call.1} parent=67 // pred_check_branch
          %929 = sbr.rel (%p927) target = $region72
        $region71: #{tpu_custom_call.1} parent=67 // pred_region
          %s930 = sand.u32 %s166, 1
          %s931 = scalar_lea.sflag [#allocation4], %s930
          %s932 = sand.u32 %s166, 1
          %s933 = smul.addr %s932, 8
          %s934 = scalar_lea.vmem [#allocation11], %s933
          %935 = dma.done %s931, 128
        $region72: #{tpu_custom_call.1} parent=67 // pred_fallthru
          _
      $region68: #{tpu_custom_call.1} parent=5 // pred_fallthru
        _
    $region6: #{tpu_custom_call.1} parent=1 // loop_footer
      %s25 = sadd.s32 1, %s21
    $region7: #{tpu_custom_call.1} parent=1 // loop_footer_branch
      %20 = sbr.rel target = $region3
    $region8: #{tpu_custom_call.1} parent=1 // loop_exit
      _
    %936 = vsyncpa [#allocation3], 1
    %s937 = scalar_lea.sflag [#allocation3], 1
    %938 = vsyncpa %s937, 1
    %939 = vsyncpa [#allocation6], 1
    %s940 = scalar_lea.sflag [#allocation6], 1
    %941 = vsyncpa %s940, 1
    %942 = vsyncpa [#allocation9], 1
    %943 = vsyncpa [#allocation4], 1
    %s944 = scalar_lea.sflag [#allocation4], 1
    %945 = vsyncpa %s944, 1

</llo_original>
